<compile_context>
chip_gen: v6e
topology: v6e:2x2x1
jax: 0.10.0
libtpu: 0.0.40
codegen_flags: <defaults>
</compile_context>

<pallas_src>
import functools

import jax
import jax.numpy as jnp
from jax.experimental import pallas as pl
from jax.experimental.pallas import tpu as pltpu

LANE = 128                              # vreg lane width
_TARGET_TILE_BYTES = 2 * 1024 * 1024    # ~2 MiB tiles: safe on v5e, fast on v6e/v7x
_MIN_TILE_BYTES = 256 * 1024            # below this, prefer the padded layout


def _scaled_relu_kernel(x_ref, o_ref, *, m):
    x = x_ref[...]
    o_ref[...] = jnp.maximum(x * m, jnp.zeros((), dtype=x.dtype))


def _plan_layout(total, itemsize):
    """Pick (rows, cols, block_rows, padded_total) for the flattened slab."""
    # Exact (pad-free) layouts first, widest lane dim first.
    for cols in (4096, 2048, 1024, 512, 256, LANE):
        if total % cols:
            continue
        rows = total // cols
        cap = max(8, (_TARGET_TILE_BYTES // (cols * itemsize)) // 8 * 8)
        if rows <= cap:
            # Single block covering the full rows dim (allowed even if rows % 8 != 0).
            return rows, cols, rows, total
        if rows % 8:
            continue
        # Largest multiple-of-8 divisor of rows that fits the tile budget.
        block_rows = None
        for cand in range(cap, 0, -8):
            if rows % cand == 0:
                block_rows = cand
                break
        if block_rows is not None and block_rows * cols * itemsize >= _MIN_TILE_BYTES:
            return rows, cols, block_rows, total
    # Ragged fallback: zero-pad to a multiple of the tile.
    cols = 1024 if total >= 1024 else LANE
    cap = max(8, (_TARGET_TILE_BYTES // (cols * itemsize)) // 8 * 8)
    rows = pl.cdiv(total, cols)
    if rows <= cap:
        return rows, cols, rows, rows * cols
    rows_padded = pl.cdiv(rows, cap) * cap
    return rows_padded, cols, cap, rows_padded * cols


def scaled_relu(x, m=1.0):
    """ScaledReLU forward: relu(m * x).  Elementwise, any shape, float dtypes."""
    orig_shape = x.shape
    total = x.size
    if total == 0:
        return x

    rows, cols, block_rows, padded_total = _plan_layout(total, x.dtype.itemsize)

    xf = x.reshape(-1)
    if padded_total != total:
        # Zero padding is safe: relu(m * 0) == 0.
        xf = jnp.pad(xf, (0, padded_total - total))
    x2 = xf.reshape(rows, cols)

    out2 = pl.pallas_call(
        functools.partial(_scaled_relu_kernel, m=float(m)),
        out_shape=jax.ShapeDtypeStruct((rows, cols), x.dtype),
        grid=(rows // block_rows,),
        in_specs=[pl.BlockSpec((block_rows, cols), lambda i: (i, 0))],
        out_specs=pl.BlockSpec((block_rows, cols), lambda i: (i, 0)),
        compiler_params=pltpu.CompilerParams(
            dimension_semantics=("parallel",)),
    )(x2)

    if padded_total != total:
        return out2.reshape(-1)[:total].reshape(orig_shape)
    return out2.reshape(orig_shape)


if __name__ == "__main__":
    key = jax.random.PRNGKey(0)
    m = 1.7  # scale factor (module default is 1.0; nontrivial value for the test)

    # Shape consistent with a PINN-style NCHW batch; size factors exactly
    # (2*4*16*16 = 2048) -> pad-free fast path, single (1, 2048) block.
    x = jax.random.normal(key, (2, 4, 16, 16), dtype=jnp.float32)
    y = jax.block_until_ready(scaled_relu(x, m=m))
    y_ref = jnp.maximum(m * x, 0.0)
    assert y.shape == x.shape and y.dtype == x.dtype
    assert jnp.allclose(y, y_ref, atol=1e-6), "mismatch vs reference (exact path)"

    # Ragged size -> exercises the zero-pad fallback path.
    x2 = jax.random.normal(jax.random.PRNGKey(1), (3, 5, 7), dtype=jnp.float32)
    y2 = jax.block_until_ready(scaled_relu(x2, m=m))
    y2_ref = jnp.maximum(m * x2, 0.0)
    assert y2.shape == x2.shape and y2.dtype == x2.dtype
    assert jnp.allclose(y2, y2_ref, atol=1e-6), "mismatch vs reference (padded path)"

    print("KERNEL_OK")
</pallas_src>

<mosaic_0001>
module attributes {stable_mosaic.version = 11 : i64} {
  func.func @_scaled_relu_kernel(%arg0: i32, %arg1: memref<1x2048xf32, #tpu.memory_space<vmem>>, %arg2: memref<1x2048xf32, #tpu.memory_space<vmem>>) attributes {dimension_semantics = [#tpu.dimension_semantics<parallel>], iteration_bounds = array<i64: 1>, scalar_prefetch = 0 : i64, scratch_operands = 0 : i64, tpu.core_type = #tpu.core_type<tc>, window_params = [{transform_indices = @transform_0, window_bounds = array<i64: 1, 2048>}, {transform_indices = @transform_1, window_bounds = array<i64: 1, 2048>}]} {
    %c0 = arith.constant 0 : index
    %c0_0 = arith.constant 0 : index
    %0 = vector.load %arg1[%c0, %c0_0] : memref<1x2048xf32, #tpu.memory_space<vmem>>, vector<1x2048xf32>
    %cst = arith.constant 1.700000e+00 : f32
    %1 = vector.broadcast %cst : f32 to vector<1x2048xf32>
    %2 = arith.mulf %0, %1 : vector<1x2048xf32>
    %cst_1 = arith.constant 0.000000e+00 : f32
    %3 = vector.broadcast %cst_1 : f32 to vector<1x2048xf32>
    %4 = arith.maximumf %2, %3 : vector<1x2048xf32>
    %c0_2 = arith.constant 0 : index
    %c0_3 = arith.constant 0 : index
    %5 = vector.load %arg2[%c0_2, %c0_3] : memref<1x2048xf32, #tpu.memory_space<vmem>>, vector<1x2048xf32>
    tpu.vector_store %arg2[%c0_2, %c0_3], %4 {strides = array<i32>} : memref<1x2048xf32, #tpu.memory_space<vmem>>, vector<1x2048xf32>,
    return
  }
  func.func @transform_0(%arg0: i32) -> (i32, i32) {
    %c0_i32 = arith.constant 0 : i32
    %c0_i32_0 = arith.constant 0 : i32
    return %arg0, %c0_i32 : i32, i32
  }
  func.func @transform_1(%arg0: i32) -> (i32, i32) {
    %c0_i32 = arith.constant 0 : i32
    %c0_i32_0 = arith.constant 0 : i32
    return %arg0, %c0_i32 : i32, i32
  }
}

</mosaic_0001>

<llo_original>
// kernel: tpu_custom_call.1
$region0: #{tpu_custom_call.1}
  #allocation0 [shape = 'u32[]', space=smem, size = 0x4, offset = 0x4, fixed_abs, tag = 'smem constant byte address 0x4 - core index']
  #allocation1 [shape = 'u32[144,128]{1,0:T(1,128)}', space=vmem, size = 0x12000, scoped, tag = 'internal scratch']
  %s0 = inlined_call_operand.hbm [shape: f32[1,2048], index: 0, kind: input, shape index: {}]
  %s1 = inlined_call_operand.hbm [shape: f32[1,2048], index: 1, kind: output, shape index: {}]
  %s2 = sld [smem:[#allocation0]]
  $region18: #{tpu_custom_call.1} parent=0
    _
  %s4 = ssub.s32 1, %s2
  %s5 = scalar_select 0, %s4, %s2
  $region1: #{tpu_custom_call.1} parent=0
    #allocation2 [shape = 'u8[8192]{0}', space=vmem, size = 0x2000, scoped, tag = 'input window, operand 0, single buffered']
    #allocation3 [shape = 's32[1]{0}', space=sflag, size = 0x4, scoped, tag = 'scoped memory for tpu_custom_call.1']
    #allocation4 [shape = 's32[1]{0}', space=sflag, size = 0x4, scoped, tag = 'scoped memory for tpu_custom_call.1']
    #allocation5 [shape = 'u8[8192]{0}', space=vmem, size = 0x2000, scoped, tag = 'output window, operand 0, single buffered']
    %6 = vsyncpa [#allocation3], 0
    %7 = vsyncpa [#allocation4], 0
    // Predicated region
    $region2: #{tpu_custom_call.1} parent=1 // pred_check
      _
    $region3: #{tpu_custom_call.1} parent=1 // pred_check_branch
      %9 = sbr.rel (0) target = $region5
    $region4: #{tpu_custom_call.1} parent=1 // pred_region
      %s11 = ssub.s32 256, 256
      %12 = vsyncadd [#allocation3], %s11
      %s14 = sshll.u32 [#allocation2], 4
      %s15 = int_to_ptr.vmem [resolvable:$true] %s14
      %17 = dma.hbm_to_vmem [thread:$0]  %s0, 256, %s15, [#allocation3]
    $region5: #{tpu_custom_call.1} parent=1 // pred_fallthru
      _
    // Predicated region
    $region6: #{tpu_custom_call.1} parent=1 // pred_check
      _
    $region7: #{tpu_custom_call.1} parent=1 // pred_check_branch
      %19 = sbr.rel (0) target = $region9
    $region8: #{tpu_custom_call.1} parent=1 // pred_region
      %20 = dma.done [#allocation3], 256
    $region9: #{tpu_custom_call.1} parent=1 // pred_fallthru
      _
    %v21 = vld [vmem:[#allocation2] sm:$0xff]
    %v22 = vld [vmem:[#allocation2 + $0x8] sm:$0xff]
    %v23 = vmul.f32 %v21, 1.7
    %v24 = vmul.f32 %v22, 1.7
    %v25 = vmax.f32 %v23, 0.0
    %v26 = vmax.f32 %v24, 0.0
    %27 = vst [vmem:[#allocation5] sm:$0xff] %v25
    %28 = vst [vmem:[#allocation5 + $0x8] sm:$0xff] %v26
    // Predicated region
    $region10: #{tpu_custom_call.1} parent=1 // pred_check
      _
    $region11: #{tpu_custom_call.1} parent=1 // pred_check_branch
      %30 = sbr.rel (0) target = $region13
    $region12: #{tpu_custom_call.1} parent=1 // pred_region
      %s32 = ssub.s32 256, 256
      %33 = vsyncadd [#allocation4], %s32
      %s35 = sshll.u32 [#allocation5], 4
      %s36 = int_to_ptr.vmem [resolvable:$true] %s35
      %38 = dma.vmem_to_hbm [thread:$0]  %s36, 256, %s1, [#allocation4]
    $region13: #{tpu_custom_call.1} parent=1 // pred_fallthru
      _
    // Predicated region
    $region14: #{tpu_custom_call.1} parent=1 // pred_check
      _
    $region15: #{tpu_custom_call.1} parent=1 // pred_check_branch
      %40 = sbr.rel (0) target = $region17
    $region16: #{tpu_custom_call.1} parent=1 // pred_region
      %41 = dma.done [#allocation4], 256
    $region17: #{tpu_custom_call.1} parent=1 // pred_fallthru
      _
    %42 = vsyncpa [#allocation3], 1
    %43 = vsyncpa [#allocation4], 1

</llo_original>
